<compile_context>
chip_gen: v5e
topology: v5e:2x2
jax: 0.10.0
libtpu: 0.0.40
codegen_flags: <defaults>
</compile_context>

<pallas_src>
import functools

import jax
import jax.numpy as jnp
from jax import lax
from jax.experimental import pallas as pl
from jax.experimental.pallas import tpu as pltpu


def _round_up(x, m):
    return ((x + m - 1) // m) * m


# --------------------------------------------------------------------------------------
# Kernel 1: one-shot K|V projection  kv = key_nodes @ [W_K.T | W_V.T] + [b_K | b_V]
# --------------------------------------------------------------------------------------
def _kv_proj_kernel(k_ref, wkv_ref, bkv_ref, kv_ref):
    kv_ref[...] = (
        jnp.dot(k_ref[...], wkv_ref[...], preferred_element_type=jnp.float32)
        + bkv_ref[...]
    ).astype(kv_ref.dtype)


# --------------------------------------------------------------------------------------
# Kernel 2: flash-style cross attention over pre-projected K|V
# --------------------------------------------------------------------------------------
def _flash_kernel(q_ref, kv_ref, wq_ref, bq_ref, o_ref,
                  qp_ref, m_ref, l_ref, *,
                  num_heads, head_dim, hidden_dim, n_keys, tk, mask_keys):
    """Grid step (i, j): query tile i  x  key tile j (online softmax over j).

    q_ref  : (tq, H)   query node features tile (compute dtype)
    kv_ref : (tk, 2H)  pre-projected [K | V] tile (compute dtype)
    wq_ref : (H, H)    W_Q.T with 1/sqrt(head_dim) folded in (compute dtype)
    bq_ref : (1, H)    b_Q / sqrt(head_dim) (f32)
    o_ref  : (tq, H)   f32 output tile; doubles as the accumulator (VMEM-resident over j)
    qp_ref : (tq, H)   projected queries scratch (compute dtype)
    m_ref  : (tq, nh)  running max per head (f32)
    l_ref  : (tq, nh)  running softmax denominator per head (f32)
    """
    j = pl.program_id(1)
    last_j = pl.num_programs(1) - 1

    @pl.when(j == 0)
    def _init():
        # Fused full-width query projection (scale folded into weights); once per q tile.
        qp = (jnp.dot(q_ref[...], wq_ref[...], preferred_element_type=jnp.float32)
              + bq_ref[...])
        qp_ref[...] = qp.astype(qp_ref.dtype)
        m_ref[...] = jnp.full_like(m_ref, -jnp.inf)
        l_ref[...] = jnp.zeros_like(l_ref)
        o_ref[...] = jnp.zeros_like(o_ref)

    kv = kv_ref[...]                                     # (tk, 2H), projected once globally
    qp = qp_ref[...]                                     # (tq, H)

    if mask_keys:
        # Single per-step additive bias (finite, not -inf) — one select, reused by all heads.
        key_idx = j * tk + lax.broadcasted_iota(jnp.int32, (1, tk), 1)
        neg_bias = jnp.where(key_idx < n_keys,
                             jnp.float32(0.0), jnp.float32(-1e30))          # (1, tk)

    contract_last = (((1,), (1,)), ((), ()))             # contract last axes, no batch

    # NOTE: head_dim < 128 makes these lane slices masked vector ops; prefer
    # lane-aligned head_dim (>=128) for production shapes.
    for h in range(num_heads):
        lo = h * head_dim
        q_h = qp[:, lo:lo + head_dim]                                   # (tq, d)
        k_h = kv[:, lo:lo + head_dim]                                   # (tk, d)
        v_h = kv[:, hidden_dim + lo:hidden_dim + lo + head_dim]        # (tk, d)

        s = lax.dot_general(q_h, k_h, contract_last,
                            preferred_element_type=jnp.float32)         # (tq, tk) f32
        if mask_keys:
            s = s + neg_bias

        m_prev = m_ref[:, h:h + 1]                                       # (tq, 1)
        m_new = jnp.maximum(m_prev, jnp.max(s, axis=-1, keepdims=True))
        alpha = jnp.exp(m_prev - m_new)                                  # (tq, 1)
        p = jnp.exp(s - m_new)                                           # (tq, tk) f32

        l_ref[:, h:h + 1] = alpha * l_ref[:, h:h + 1] + jnp.sum(p, axis=-1, keepdims=True)
        o_ref[:, lo:lo + head_dim] = (
            alpha * o_ref[:, lo:lo + head_dim]
            + jnp.dot(p.astype(kv.dtype), v_h, preferred_element_type=jnp.float32))
        m_ref[:, h:h + 1] = m_new

    @pl.when(j == last_j)
    def _finalize():
        for h in range(num_heads):
            lo = h * head_dim
            inv = pl.reciprocal(l_ref[:, h:h + 1], approx=True)          # EUP slot
            o_ref[:, lo:lo + head_dim] = o_ref[:, lo:lo + head_dim] * inv


# --------------------------------------------------------------------------------------
# Wrapper
# --------------------------------------------------------------------------------------
def cross_attention_layer(query_nodes, key_nodes, params, *, num_heads,
                          q_tile=256, k_tile=256, compute_dtype=jnp.bfloat16):
    """Pallas implementation of CrossAttentionLayer.forward.

    query_nodes: (N_q, hidden_dim) float32
    key_nodes:   (N_k, hidden_dim) float32
    params: dict with 'W_Q','b_Q','W_K','b_K','W_V','b_V' in torch Linear convention
            (W: (out, in), y = x @ W.T + b).
    returns: (N_q, hidden_dim) float32
    """
    n_q, hidden_dim = query_nodes.shape
    n_k, _ = key_nodes.shape
    head_dim = hidden_dim // num_heads
    assert head_dim * num_heads == hidden_dim, "hidden_dim must be divisible by num_heads"
    scale = float(head_dim) ** 0.5

    # --- fold scale into the query projection; fuse K|V projection weights -------------
    wq = (params["W_Q"].T / scale).astype(compute_dtype)                       # (H, H)
    bq = (params["b_Q"] / scale).reshape(1, hidden_dim).astype(jnp.float32)    # (1, H)
    wkv = jnp.concatenate([params["W_K"].T, params["W_V"].T], axis=1).astype(compute_dtype)
    bkv = jnp.concatenate([params["b_K"], params["b_V"]]
                          ).reshape(1, 2 * hidden_dim).astype(jnp.float32)

    # --- tile sizes (sublane-aligned), with padding to exact multiples ------------------
    q_tile = _round_up(max(q_tile, 8), 8)
    k_tile = _round_up(max(k_tile, 8), 8)

    if n_q > q_tile:
        tq = q_tile
    else:
        tq = _round_up(n_q, 8)
        if n_q >= 256:     # keep both v7x TensorCores busy on the "parallel" query axis
            tq = _round_up(-(-n_q // 2), 8)
    tk = k_tile if n_k > k_tile else _round_up(n_k, 8)

    n_q_pad = _round_up(n_q, tq)
    n_k_pad = _round_up(n_k, tk)
    mask_keys = n_k_pad != n_k

    q_in = query_nodes.astype(compute_dtype)
    k_in = key_nodes.astype(compute_dtype)
    if n_q_pad != n_q:
        q_in = jnp.pad(q_in, ((0, n_q_pad - n_q), (0, 0)))
    if n_k_pad != n_k:
        k_in = jnp.pad(k_in, ((0, n_k_pad - n_k), (0, 0)))

    vmem_limit = 48 * 1024 * 1024   # explicit, below v7x's 64 MiB physical, above defaults

    # --- stage 1: project K|V once (emits compute_dtype to HBM) -------------------------
    kv_proj = pl.pallas_call(
        _kv_proj_kernel,
        out_shape=jax.ShapeDtypeStruct((n_k_pad, 2 * hidden_dim), compute_dtype),
        grid_spec=pltpu.PrefetchScalarGridSpec(
            num_scalar_prefetch=0,
            grid=(n_k_pad // tk,),
            in_specs=[
                pl.BlockSpec((tk, hidden_dim), lambda i: (i, 0)),            # key rows
                pl.BlockSpec((hidden_dim, 2 * hidden_dim), lambda i: (0, 0)),  # [W_K.T|W_V.T]
                pl.BlockSpec((1, 2 * hidden_dim), lambda i: (0, 0)),           # [b_K|b_V]
            ],
            out_specs=pl.BlockSpec((tk, 2 * hidden_dim), lambda i: (i, 0))),
        compiler_params=pltpu.CompilerParams(
            dimension_semantics=("parallel",),
            vmem_limit_bytes=vmem_limit),
    )(k_in, wkv, bkv)

    # --- stage 2: flash-style attention over the pre-projected K|V ----------------------
    grid = (n_q_pad // tq, n_k_pad // tk)
    kernel = functools.partial(
        _flash_kernel,
        num_heads=num_heads, head_dim=head_dim, hidden_dim=hidden_dim,
        n_keys=n_k, tk=tk, mask_keys=mask_keys)

    out = pl.pallas_call(
        kernel,
        out_shape=jax.ShapeDtypeStruct((n_q_pad, hidden_dim), jnp.float32),
        grid_spec=pltpu.PrefetchScalarGridSpec(
            num_scalar_prefetch=0,
            grid=grid,
            in_specs=[
                pl.BlockSpec((tq, hidden_dim), lambda i, j: (i, 0)),          # query tile
                pl.BlockSpec((tk, 2 * hidden_dim), lambda i, j: (j, 0)),      # projected K|V tile
                pl.BlockSpec((hidden_dim, hidden_dim), lambda i, j: (0, 0)),  # W_Q.T / scale
                pl.BlockSpec((1, hidden_dim), lambda i, j: (0, 0)),           # b_Q / scale
            ],
            out_specs=pl.BlockSpec((tq, hidden_dim), lambda i, j: (i, 0)),    # lane-dense
            scratch_shapes=[
                pltpu.VMEM((tq, hidden_dim), compute_dtype),   # projected queries
                pltpu.VMEM((tq, num_heads), jnp.float32),      # running max per head
                pltpu.VMEM((tq, num_heads), jnp.float32),      # running denom per head
            ]),
        compiler_params=pltpu.CompilerParams(
            dimension_semantics=("parallel", "arbitrary"),
            vmem_limit_bytes=vmem_limit),
    )(q_in, kv_proj, wq, bq)

    return out[:n_q]


# --------------------------------------------------------------------------------------
# Pure-JAX reference mirroring the PyTorch forward exactly (f32 throughout)
# --------------------------------------------------------------------------------------
def _reference(query_nodes, key_nodes, params, *, num_heads):
    n_q, hidden_dim = query_nodes.shape
    n_k, _ = key_nodes.shape
    head_dim = hidden_dim // num_heads
    scale = float(head_dim) ** 0.5

    Q = query_nodes @ params["W_Q"].T + params["b_Q"]
    K = key_nodes @ params["W_K"].T + params["b_K"]
    V = key_nodes @ params["W_V"].T + params["b_V"]
    Q = Q.reshape(n_q, num_heads, head_dim).transpose(1, 0, 2)
    K = K.reshape(n_k, num_heads, head_dim).transpose(1, 0, 2)
    V = V.reshape(n_k, num_heads, head_dim).transpose(1, 0, 2)
    scores = jnp.einsum("hqd,hkd->hqk", Q, K) / scale
    w = jax.nn.softmax(scores, axis=-1)
    out = jnp.einsum("hqk,hkd->hqd", w, V)
    return out.transpose(1, 0, 2).reshape(n_q, hidden_dim)


if __name__ == "__main__":
    # Small deterministic setup consistent with the module:
    #   query_nodes: (N_q, hidden_dim), key_nodes: (N_k, hidden_dim)
    # N_K = 20 is deliberately not a multiple of 8 so the key-padding/mask path runs.
    N_Q, N_K, HIDDEN, NUM_HEADS = 16, 20, 32, 4

    key = jax.random.PRNGKey(0)
    k_q, k_k, k_wq, k_bq, k_wk, k_bk, k_wv, k_bv = jax.random.split(key, 8)

    query_nodes = jax.random.normal(k_q, (N_Q, HIDDEN), dtype=jnp.float32)
    key_nodes = jax.random.normal(k_k, (N_K, HIDDEN), dtype=jnp.float32)

    bound = 1.0 / (HIDDEN ** 0.5)
    params = {
        "W_Q": jax.random.uniform(k_wq, (HIDDEN, HIDDEN), jnp.float32, -bound, bound),
        "b_Q": jax.random.uniform(k_bq, (HIDDEN,), jnp.float32, -bound, bound),
        "W_K": jax.random.uniform(k_wk, (HIDDEN, HIDDEN), jnp.float32, -bound, bound),
        "b_K": jax.random.uniform(k_bk, (HIDDEN,), jnp.float32, -bound, bound),
        "W_V": jax.random.uniform(k_wv, (HIDDEN, HIDDEN), jnp.float32, -bound, bound),
        "b_V": jax.random.uniform(k_bv, (HIDDEN,), jnp.float32, -bound, bound),
    }

    ref = _reference(query_nodes, key_nodes, params, num_heads=NUM_HEADS)

    # 1) f32 compute path, single query/key tile (last-tile mask active); tight tolerance
    #    (approx reciprocal on the EUP is the only deliberate accuracy loss).
    out_f32 = cross_attention_layer(query_nodes, key_nodes, params,
                                    num_heads=NUM_HEADS, compute_dtype=jnp.float32)
    out_f32 = jax.block_until_ready(out_f32)
    assert out_f32.shape == (N_Q, HIDDEN)
    assert jnp.allclose(out_f32, ref, atol=2e-3, rtol=2e-3), "mismatch (f32, single tile)"

    # 2) default bf16 MXU path; tolerance loosened for bf16 operands (f32 accumulation).
    out_bf16 = cross_attention_layer(query_nodes, key_nodes, params, num_heads=NUM_HEADS)
    out_bf16 = jax.block_until_ready(out_bf16)
    assert jnp.allclose(out_bf16, ref, atol=5e-2, rtol=5e-2), "mismatch (bf16, single tile)"

    # 3) multi-tile path: 2 query tiles x 3 key tiles — exercises the corrected key-row
    #    index_map, online softmax across key tiles, and masking of the padded tail.
    out_tiled = cross_attention_layer(query_nodes, key_nodes, params,
                                      num_heads=NUM_HEADS, q_tile=8, k_tile=8,
                                      compute_dtype=jnp.float32)
    out_tiled = jax.block_until_ready(out_tiled)
    assert jnp.allclose(out_tiled, ref, atol=2e-3, rtol=2e-3), "mismatch (tiled q/k)"

    print("KERNEL_OK")
</pallas_src>

<mosaic_0001>
module attributes {stable_mosaic.version = 11 : i64} {
  func.func @_kv_proj_kernel(%arg0: i32, %arg1: memref<24x32xf32, #tpu.memory_space<vmem>>, %arg2: memref<32x64xf32, #tpu.memory_space<vmem>>, %arg3: memref<1x64xf32, #tpu.memory_space<vmem>>, %arg4: memref<24x64xf32, #tpu.memory_space<vmem>>) attributes {dimension_semantics = [#tpu.dimension_semantics<parallel>], iteration_bounds = array<i64: 1>, scalar_prefetch = 0 : i64, scratch_operands = 0 : i64, tpu.core_type = #tpu.core_type<tc>, window_params = [{transform_indices = @transform_0, window_bounds = array<i64: 24, 32>}, {pipeline_mode = #tpu.pipeline_mode<synchronous>, transform_indices = @transform_1, window_bounds = array<i64: 32, 64>}, {pipeline_mode = #tpu.pipeline_mode<synchronous>, transform_indices = @transform_2, window_bounds = array<i64: 1, 64>}, {transform_indices = @transform_3, window_bounds = array<i64: 24, 64>}]} {
    %c0 = arith.constant 0 : index
    %c0_0 = arith.constant 0 : index
    %0 = vector.load %arg1[%c0, %c0_0] : memref<24x32xf32, #tpu.memory_space<vmem>>, vector<24x32xf32>
    %c0_1 = arith.constant 0 : index
    %c0_2 = arith.constant 0 : index
    %1 = vector.load %arg2[%c0_1, %c0_2] : memref<32x64xf32, #tpu.memory_space<vmem>>, vector<32x64xf32>
    %cst = arith.constant dense<0.000000e+00> : vector<24x64xf32>
    %2 = tpu.matmul %0, %1, %cst {dimension_numbers = #tpu.dot_dimension_numbers<[1], [0], [0], [1], [0, 0, 1, 1], [], []>} : vector<24x32xf32>, vector<32x64xf32>, vector<24x64xf32> -> vector<24x64xf32>
    %c0_3 = arith.constant 0 : index
    %c0_4 = arith.constant 0 : index
    %3 = vector.load %arg3[%c0_3, %c0_4] : memref<1x64xf32, #tpu.memory_space<vmem>>, vector<1x64xf32>
    %4 = vector.broadcast %3 : vector<1x64xf32> to vector<24x64xf32>
    %5 = arith.addf %2, %4 : vector<24x64xf32>
    %c0_5 = arith.constant 0 : index
    %c0_6 = arith.constant 0 : index
    %6 = vector.load %arg4[%c0_5, %c0_6] : memref<24x64xf32, #tpu.memory_space<vmem>>, vector<24x64xf32>
    tpu.vector_store %arg4[%c0_5, %c0_6], %5 {strides = array<i32>} : memref<24x64xf32, #tpu.memory_space<vmem>>, vector<24x64xf32>,
    return
  }
  func.func @transform_0(%arg0: i32) -> (i32, i32) {
    %c0_i32 = arith.constant 0 : i32
    %c0_i32_0 = arith.constant 0 : i32
    return %arg0, %c0_i32 : i32, i32
  }
  func.func @transform_1(%arg0: i32) -> (i32, i32) {
    %c0_i32 = arith.constant 0 : i32
    %c0_i32_0 = arith.constant 0 : i32
    %c0_i32_1 = arith.constant 0 : i32
    return %c0_i32, %c0_i32_0 : i32, i32
  }
  func.func @transform_2(%arg0: i32) -> (i32, i32) {
    %c0_i32 = arith.constant 0 : i32
    %c0_i32_0 = arith.constant 0 : i32
    %c0_i32_1 = arith.constant 0 : i32
    return %c0_i32, %c0_i32_0 : i32, i32
  }
  func.func @transform_3(%arg0: i32) -> (i32, i32) {
    %c0_i32 = arith.constant 0 : i32
    %c0_i32_0 = arith.constant 0 : i32
    return %arg0, %c0_i32 : i32, i32
  }
}

</mosaic_0001>

<llo_original>
// kernel: tpu_custom_call.1
$region0: #{tpu_custom_call.1}
  #allocation0 [shape = 'u32[]', space=smem, size = 0x4, offset = 0x4, fixed_abs, tag = 'smem constant byte address 0x4 - core index']
  #allocation1 [shape = 'u32[72,128]{1,0:T(1,128)}', space=vmem, size = 0x9000, scoped, tag = 'internal scratch']
  %s0 = inlined_call_operand.hbm [shape: f32[24,32], index: 0, kind: input, shape index: {}]
  %s1 = inlined_call_operand.hbm [shape: f32[32,64], index: 1, kind: input, shape index: {}]
  %s2 = inlined_call_operand.vmem [shape: f32[1,64], index: 2, kind: input, shape index: {}]
  %s3 = inlined_call_operand.hbm [shape: f32[24,64], index: 3, kind: output, shape index: {}]
  %s4 = sld [smem:[#allocation0]]
  $region30: #{tpu_custom_call.1} parent=0
    _
  %s6 = ssub.s32 1, %s4
  %s7 = scalar_select 0, %s6, %s4
  $region1: #{tpu_custom_call.1} parent=0
    #allocation2 [shape = 'u8[12288]{0}', space=vmem, size = 0x3000, scoped, tag = 'input window, operand 0, single buffered']
    #allocation3 [shape = 's32[1]{0}', space=sflag, size = 0x4, scoped, tag = 'scoped memory for tpu_custom_call.1']
    #allocation4 [shape = 's32[1]{0}', space=sflag, size = 0x4, scoped, tag = 'scoped memory for tpu_custom_call.1']
    #allocation5 [shape = 'u8[16384]{0}', space=vmem, size = 0x4000, scoped, tag = 'input window, operand 1, single buffered']
    #allocation6 [shape = 's32[1]{0}', space=sflag, size = 0x4, scoped, tag = 'scoped memory for tpu_custom_call.1']
    #allocation7 [shape = 'u8[12288]{0}', space=vmem, size = 0x3000, scoped, tag = 'output window, operand 0, single buffered']
    %8 = vsyncpa [#allocation3], 0
    %9 = vsyncpa [#allocation6], 0
    %10 = vsyncpa [#allocation4], 0
    // Predicated region
    $region2: #{tpu_custom_call.1} parent=1 // pred_check
      _
    $region3: #{tpu_custom_call.1} parent=1 // pred_check_branch
      %12 = sbr.rel (0) target = $region5
    $region4: #{tpu_custom_call.1} parent=1 // pred_region
      %14 = vsyncadd [#allocation3], 0
      %s15 = sshll.u32 %s0, 4
      %s16 = int_to_ptr.hbm [resolvable:$true] %s15
      %s17 = sshll.u32 [#allocation2], 4
      %s18 = int_to_ptr.vmem [resolvable:$true] %s17
      %23 = dma.hbm_to_vmem [thread:$0]  %s16, 384, %s18, [#allocation3], 128, 128, 8
    $region5: #{tpu_custom_call.1} parent=1 // pred_fallthru
      _
    // Predicated region
    $region6: #{tpu_custom_call.1} parent=1 // pred_check
      _
    $region7: #{tpu_custom_call.1} parent=1 // pred_check_branch
      %25 = sbr.rel (0) target = $region9
    $region8: #{tpu_custom_call.1} parent=1 // pred_region
      %27 = vsyncadd [#allocation6], 0
      %s28 = sshll.u32 %s1, 4
      %s29 = int_to_ptr.hbm [resolvable:$true] %s28
      %s30 = sshll.u32 [#allocation5], 4
      %s31 = int_to_ptr.vmem [resolvable:$true] %s30
      %36 = dma.hbm_to_vmem [thread:$0]  %s29, 512, %s31, [#allocation6], 128, 128, 8
    $region9: #{tpu_custom_call.1} parent=1 // pred_fallthru
      _
    // Predicated region
    $region10: #{tpu_custom_call.1} parent=1 // pred_check
      _
    $region11: #{tpu_custom_call.1} parent=1 // pred_check_branch
      %38 = sbr.rel (0) target = $region13
    $region12: #{tpu_custom_call.1} parent=1 // pred_region
      _
    $region13: #{tpu_custom_call.1} parent=1 // pred_fallthru
      _
    // Predicated region
    $region14: #{tpu_custom_call.1} parent=1 // pred_check
      _
    $region15: #{tpu_custom_call.1} parent=1 // pred_check_branch
      %40 = sbr.rel (0) target = $region17
    $region16: #{tpu_custom_call.1} parent=1 // pred_region
      %42 = dma.done [#allocation3], 384
    $region17: #{tpu_custom_call.1} parent=1 // pred_fallthru
      _
    // Predicated region
    $region18: #{tpu_custom_call.1} parent=1 // pred_check
      _
    $region19: #{tpu_custom_call.1} parent=1 // pred_check_branch
      %44 = sbr.rel (0) target = $region21
    $region20: #{tpu_custom_call.1} parent=1 // pred_region
      %46 = dma.done [#allocation6], 512
    $region21: #{tpu_custom_call.1} parent=1 // pred_fallthru
      _
    %v47 = vld [vmem:[#allocation2] sm:$0xff]
    %v48 = vld [vmem:[#allocation2 + $0x8] sm:$0xff]
    %v49 = vld [vmem:[#allocation2 + $0x10] sm:$0xff]
    %v50 = vld [vmem:[#allocation5] sm:$0xff]
    %v51 = vld [vmem:[#allocation5 + $0x8] sm:$0xff]
    %v52 = vld [vmem:[#allocation5 + $0x10] sm:$0xff]
    %v53 = vld [vmem:[#allocation5 + $0x18] sm:$0xff]
    %v54 = vld [vmem:[%s2] sm:$0x1]
    %v56 = vperm.slane %v54, 0
    %vm58 = vcmask 261120
    %v60 = vsel %vm58, %v47, 0
    %v63 = vsel %vm58, %v48, 0
    %v66 = vsel %vm58, %v49, 0
    %68 = vmatpush.msra.mxu0 0.0
    %69 = vmatpush.msra.mxu0 0.0
    %70 = vmatpush.msra.mxu0 0.0
    %71 = vmatpush.msra.mxu0 0.0
    %72 = vmatpush.msra.mxu0 0.0
    %73 = vmatpush.msra.mxu0 0.0
    %74 = vmatpush.msra.mxu0 0.0
    %75 = vmatpush.msra.mxu0 0.0
    %76 = vmatpush.msra.mxu0 0.0
    %77 = vmatpush.msra.mxu0 0.0
    %78 = vmatpush.msra.mxu0 0.0
    %79 = vmatpush.msra.mxu0 0.0
    %80 = vmatpush.msra.mxu0 %v53
    %81 = vmatpush.msra.mxu0 %v52
    %82 = vmatpush.msra.mxu0 %v51
    %83 = vmatpush.msra.mxu0 %v50
    %84 = vmatmul.f32.gmra.mxu0 %v60
    %v85 = vpop.f32.mrf.mxu0
    %v86 = vadd.f32 %v56, %v85
    %87 = vmatmul.f32.gmra.mxu0 %v63
    %v88 = vpop.f32.mrf.mxu0
    %v89 = vadd.f32 %v56, %v88
    %90 = vmatmul.f32.gmra.mxu0 %v66
    %v91 = vpop.f32.mrf.mxu0
    %v92 = vadd.f32 %v56, %v91
    %93 = vdwg.mxu0
    %vm94 = vcmask 523264
    %95 = vst.msk [vmem:[#allocation7] sm:$0xff] %vm94, %v86
    %96 = vst.msk [vmem:[#allocation7 + $0x8] sm:$0xff] %vm94, %v89
    %97 = vst.msk [vmem:[#allocation7 + $0x10] sm:$0xff] %vm94, %v92
    // Predicated region
    $region22: #{tpu_custom_call.1} parent=1 // pred_check
      _
    $region23: #{tpu_custom_call.1} parent=1 // pred_check_branch
      %99 = sbr.rel (0) target = $region25
    $region24: #{tpu_custom_call.1} parent=1 // pred_region
      %101 = vsyncadd [#allocation4], 0
      %s102 = sshll.u32 [#allocation7], 4
      %s103 = int_to_ptr.vmem [resolvable:$true] %s102
      %s104 = sshll.u32 %s3, 4
      %s105 = int_to_ptr.hbm [resolvable:$true] %s104
      %110 = dma.vmem_to_hbm [thread:$0]  %s103, 384, %s105, [#allocation4], 128, 128, 8
    $region25: #{tpu_custom_call.1} parent=1 // pred_fallthru
      _
    // Predicated region
    $region26: #{tpu_custom_call.1} parent=1 // pred_check
      _
    $region27: #{tpu_custom_call.1} parent=1 // pred_check_branch
      %112 = sbr.rel (0) target = $region29
    $region28: #{tpu_custom_call.1} parent=1 // pred_region
      %114 = dma.done [#allocation4], 384
    $region29: #{tpu_custom_call.1} parent=1 // pred_fallthru
      _
    %115 = vsyncpa [#allocation3], 1
    %116 = vsyncpa [#allocation6], 1
    %117 = vsyncpa [#allocation4], 1

</llo_original>
